<compile_context>
chip_gen: v6e
topology: v6e:2x2x1
jax: 0.10.0
libtpu: 0.0.40
codegen_flags: <defaults>
</compile_context>

<pallas_src>
import jax
import jax.numpy as jnp
from jax import lax
from jax.experimental import pallas as pl
from jax.experimental.pallas import tpu as pltpu


def _make_mha_kernel(temperature: float):
    inv_temp = 1.0 / float(temperature)

    def kernel(x_ref, q_ref, w_ref, o_ref, acc_ref):
        # x_ref: (1, TN, D)  q_ref: (C, D)  w_ref: (1, C)
        # o_ref: (1, 1, D)   acc_ref: (1, D) f32 scratch
        n = pl.program_id(1)

        @pl.when(n == 0)
        def _():
            acc_ref[...] = jnp.zeros_like(acc_ref)

        x = x_ref[0]                               # (TN, D), input dtype (MXU operand)
        q = q_ref[...] * inv_temp                  # (C, D), temperature folded in
        w = w_ref[...].astype(jnp.float32)         # (1, C)

        # scores: (TN, C) = x @ q^T / temperature   (contraction on D, no transpose)
        scores = lax.dot_general(
            x, q, dimension_numbers=(((1,), (1,)), ((), ())),
            preferred_element_type=jnp.float32)

        # unnormalized softmax over classes (last axis), f32
        m = jnp.max(scores, axis=-1, keepdims=True)   # (TN, 1)
        e = jnp.exp(scores - m)                       # (TN, C)
        z = jnp.sum(e, axis=-1, keepdims=True)        # (TN, 1)

        # fused per-point scalar: s[n] = (p[n,:] . w) with p = e / z
        u = lax.dot_general(
            e, w, dimension_numbers=(((1,), (1,)), ((), ())),
            preferred_element_type=jnp.float32)       # (TN, 1)
        s = u / z                                     # (TN, 1)

        # partial output: (1, D) = s^T @ x  (single MXU reduction over points)
        partial = lax.dot_general(
            s.astype(x.dtype), x,
            dimension_numbers=(((0,), (0,)), ((), ())),
            preferred_element_type=jnp.float32)       # (1, D)
        acc_ref[...] += partial

        @pl.when(n == pl.num_programs(1) - 1)
        def _():
            o_ref[0] = acc_ref[...].astype(o_ref.dtype)

    return kernel


def _choose_n_tile(n, d, itemsize, vmem_budget_bytes=8 * 1024 * 1024):
    """Largest N tile that keeps double-buffered x tiles well under VMEM budget
    (conservative enough for v7x's 64 MiB per-TC VMEM)."""
    max_rows = max(8, vmem_budget_bytes // (2 * d * itemsize))
    if n <= max_rows:
        return n
    max_rows -= max_rows % 8
    for t in range(max_rows, 7, -8):
        if n % t == 0:
            return t
    return n  # fall back to a single full-N slab


def multi_head_attention(x, query, conv_weight, temperature):
    """x: (B, N, D), query: (C, D), conv_weight: (1, C, 1) -> out (B, 1, D)."""
    B, N, D = x.shape
    C = query.shape[0]
    w = conv_weight.reshape(1, C)   # Conv1d(C, 1, kernel_size=1, bias=False) weight

    tn = _choose_n_tile(N, D, x.dtype.itemsize)
    n_tiles = N // tn

    kernel = _make_mha_kernel(temperature)

    out = pl.pallas_call(
        kernel,
        out_shape=jax.ShapeDtypeStruct((B, 1, D), x.dtype),
        grid_spec=pltpu.PrefetchScalarGridSpec(
            num_scalar_prefetch=0,
            grid=(B, n_tiles),
            in_specs=[
                pl.BlockSpec((1, tn, D), lambda b, n: (b, n, 0)),   # x stream over N
                pl.BlockSpec((C, D), lambda b, n: (0, 0)),          # query (resident)
                pl.BlockSpec((1, C), lambda b, n: (0, 0)),          # conv weight (resident)
            ],
            out_specs=pl.BlockSpec((1, 1, D), lambda b, n: (b, 0, 0)),
            scratch_shapes=[pltpu.VMEM((1, D), jnp.float32)],        # per-batch accumulator
        ),
        compiler_params=pltpu.CompilerParams(
            dimension_semantics=("parallel", "arbitrary")),
    )(x, query, w)
    return out


def reference(x, query, conv_weight, temperature):
    scores = jnp.einsum("bnd,cd->bnc", x, query) / temperature
    scores = jax.nn.softmax(scores, axis=-1)
    gf = jnp.einsum("bnc,bnd->bcd", scores, x)
    w = conv_weight.reshape(1, -1)
    out = jnp.einsum("oc,bcd->bod", w, gf)
    return out


if __name__ == "__main__":
    key = jax.random.PRNGKey(0)
    k_x, k_q, k_w = jax.random.split(key, 3)

    B, N, D = 2, 16, 32      # batch, points (N'), feature dim
    C = 4                    # num_classes
    temperature = 2.0

    x = jax.random.normal(k_x, (B, N, D), dtype=jnp.float32)
    query = jax.random.normal(k_q, (C, D), dtype=jnp.float32)           # torch.randn(C, D)
    conv_weight = jax.random.normal(k_w, (1, C, 1), dtype=jnp.float32)  # Conv1d(C,1,1) weight

    out = multi_head_attention(x, query, conv_weight, temperature)
    out = jax.block_until_ready(out)

    ref = reference(x, query, conv_weight, temperature)
    assert out.shape == (B, 1, D), out.shape
    assert jnp.allclose(out, ref, atol=1e-4, rtol=1e-4), "mismatch vs reference"

    print("KERNEL_OK")
</pallas_src>

<mosaic_0001>
module attributes {stable_mosaic.version = 11 : i64} {
  func.func @kernel(%arg0: i32, %arg1: i32, %arg2: memref<1x16x32xf32, #tpu.memory_space<vmem>>, %arg3: memref<4x32xf32, #tpu.memory_space<vmem>>, %arg4: memref<1x4xf32, #tpu.memory_space<vmem>>, %arg5: memref<1x1x32xf32, #tpu.memory_space<vmem>>, %arg6: memref<1x32xf32, #tpu.memory_space<vmem>>) attributes {dimension_semantics = [#tpu.dimension_semantics<parallel>, #tpu.dimension_semantics<arbitrary>], iteration_bounds = array<i64: 2, 1>, scalar_prefetch = 0 : i64, scratch_operands = 1 : i64, tpu.core_type = #tpu.core_type<tc>, window_params = [{transform_indices = @transform_0, window_bounds = array<i64: 1, 16, 32>}, {pipeline_mode = #tpu.pipeline_mode<synchronous>, transform_indices = @transform_1, window_bounds = array<i64: 4, 32>}, {pipeline_mode = #tpu.pipeline_mode<synchronous>, transform_indices = @transform_2, window_bounds = array<i64: 1, 4>}, {transform_indices = @transform_3, window_bounds = array<i64: 1, 1, 32>}]} {
    %c0_i32 = arith.constant 0 : i32
    %0 = arith.cmpi eq, %arg1, %c0_i32 : i32
    %1 = arith.extui %0 : i1 to i32
    %c0_i32_0 = arith.constant 0 : i32
    %2 = arith.cmpi ne, %1, %c0_i32_0 : i32
    scf.if %2 {
      %cst_18 = arith.constant 0.000000e+00 : f32
      %26 = vector.broadcast %cst_18 : f32 to vector<1x32xf32>
      %c0_19 = arith.constant 0 : index
      %c0_20 = arith.constant 0 : index
      %27 = vector.load %arg6[%c0_19, %c0_20] : memref<1x32xf32, #tpu.memory_space<vmem>>, vector<1x32xf32>
      tpu.vector_store %arg6[%c0_19, %c0_20], %26 {strides = array<i32>} : memref<1x32xf32, #tpu.memory_space<vmem>>, vector<1x32xf32>,
    } else {
    }
    %c0 = arith.constant 0 : index
    %c0_1 = arith.constant 0 : index
    %c0_2 = arith.constant 0 : index
    %3 = vector.load %arg2[%c0, %c0_1, %c0_2] : memref<1x16x32xf32, #tpu.memory_space<vmem>>, vector<1x16x32xf32>
    %4 = vector.shape_cast %3 : vector<1x16x32xf32> to vector<16x32xf32>
    %c0_3 = arith.constant 0 : index
    %c0_4 = arith.constant 0 : index
    %5 = vector.load %arg3[%c0_3, %c0_4] : memref<4x32xf32, #tpu.memory_space<vmem>>, vector<4x32xf32>
    %cst = arith.constant 5.000000e-01 : f32
    %6 = vector.broadcast %cst : f32 to vector<4x32xf32>
    %7 = arith.mulf %5, %6 : vector<4x32xf32>
    %c0_5 = arith.constant 0 : index
    %c0_6 = arith.constant 0 : index
    %8 = vector.load %arg4[%c0_5, %c0_6] : memref<1x4xf32, #tpu.memory_space<vmem>>, vector<1x4xf32>
    %cst_7 = arith.constant dense<0.000000e+00> : vector<16x4xf32>
    %9 = tpu.matmul %4, %7, %cst_7 {dimension_numbers = #tpu.dot_dimension_numbers<[1], [1], [0], [0], [0, 0, 1, 0], [], []>} : vector<16x32xf32>, vector<4x32xf32>, vector<16x4xf32> -> vector<16x4xf32>
    %cst_8 = arith.constant dense<0xFF800000> : vector<16xf32>
    %10 = vector.multi_reduction <maximumf>, %9, %cst_8 [1] : vector<16x4xf32> to vector<16xf32>
    %11 = vector.shape_cast %10 : vector<16xf32> to vector<16x1xf32>
    %12 = vector.broadcast %11 : vector<16x1xf32> to vector<16x4xf32>
    %13 = arith.subf %9, %12 : vector<16x4xf32>
    %14 = math.exp %13 : vector<16x4xf32>
    %cst_9 = arith.constant dense<0.000000e+00> : vector<16xf32>
    %15 = vector.multi_reduction <add>, %14, %cst_9 [1] : vector<16x4xf32> to vector<16xf32>
    %16 = vector.shape_cast %15 : vector<16xf32> to vector<16x1xf32>
    %cst_10 = arith.constant dense<0.000000e+00> : vector<16x1xf32>
    %17 = tpu.matmul %14, %8, %cst_10 {dimension_numbers = #tpu.dot_dimension_numbers<[1], [1], [0], [0], [0, 0, 1, 0], [], []>} : vector<16x4xf32>, vector<1x4xf32>, vector<16x1xf32> -> vector<16x1xf32>
    %18 = arith.divf %17, %16 : vector<16x1xf32>
    %cst_11 = arith.constant dense<0.000000e+00> : vector<1x32xf32>
    %19 = tpu.matmul %18, %4, %cst_11 {dimension_numbers = #tpu.dot_dimension_numbers<[0], [0], [1], [1], [0, 1, 1, 1], [], []>} : vector<16x1xf32>, vector<16x32xf32>, vector<1x32xf32> -> vector<1x32xf32>
    %c0_12 = arith.constant 0 : index
    %c0_13 = arith.constant 0 : index
    %20 = vector.load %arg6[%c0_12, %c0_13] : memref<1x32xf32, #tpu.memory_space<vmem>>, vector<1x32xf32>
    %21 = arith.addf %20, %19 : vector<1x32xf32>
    %c0_14 = arith.constant 0 : index
    %c0_15 = arith.constant 0 : index
    %22 = vector.load %arg6[%c0_14, %c0_15] : memref<1x32xf32, #tpu.memory_space<vmem>>, vector<1x32xf32>
    tpu.vector_store %arg6[%c0_14, %c0_15], %21 {strides = array<i32>} : memref<1x32xf32, #tpu.memory_space<vmem>>, vector<1x32xf32>,
    %c0_i32_16 = arith.constant 0 : i32
    %23 = arith.cmpi eq, %arg1, %c0_i32_16 : i32
    %24 = arith.extui %23 : i1 to i32
    %c0_i32_17 = arith.constant 0 : i32
    %25 = arith.cmpi ne, %24, %c0_i32_17 : i32
    scf.if %25 {
      %c0_18 = arith.constant 0 : index
      %c0_19 = arith.constant 0 : index
      %26 = vector.load %arg6[%c0_18, %c0_19] : memref<1x32xf32, #tpu.memory_space<vmem>>, vector<1x32xf32>
      %c0_20 = arith.constant 0 : index
      %c0_21 = arith.constant 0 : index
      %c0_22 = arith.constant 0 : index
      %27 = vector.load %arg5[%c0_20, %c0_21, %c0_22] : memref<1x1x32xf32, #tpu.memory_space<vmem>>, vector<1x1x32xf32>
      %28 = vector.shape_cast %27 : vector<1x1x32xf32> to vector<1x32xf32>
      %29 = vector.shape_cast %26 : vector<1x32xf32> to vector<1x1x32xf32>
      tpu.vector_store %arg5[%c0_20, %c0_21, %c0_22], %29 {strides = array<i32>} : memref<1x1x32xf32, #tpu.memory_space<vmem>>, vector<1x1x32xf32>,
    } else {
    }
    return
  }
  func.func @transform_0(%arg0: i32, %arg1: i32) -> (i32, i32, i32) {
    %c0_i32 = arith.constant 0 : i32
    %c0_i32_0 = arith.constant 0 : i32
    return %arg0, %arg1, %c0_i32 : i32, i32, i32
  }
  func.func @transform_1(%arg0: i32, %arg1: i32) -> (i32, i32) {
    %c0_i32 = arith.constant 0 : i32
    %c0_i32_0 = arith.constant 0 : i32
    %c0_i32_1 = arith.constant 0 : i32
    return %c0_i32, %c0_i32_0 : i32, i32
  }
  func.func @transform_2(%arg0: i32, %arg1: i32) -> (i32, i32) {
    %c0_i32 = arith.constant 0 : i32
    %c0_i32_0 = arith.constant 0 : i32
    %c0_i32_1 = arith.constant 0 : i32
    return %c0_i32, %c0_i32_0 : i32, i32
  }
  func.func @transform_3(%arg0: i32, %arg1: i32) -> (i32, i32, i32) {
    %c0_i32 = arith.constant 0 : i32
    %c0_i32_0 = arith.constant 0 : i32
    %c0_i32_1 = arith.constant 0 : i32
    return %arg0, %c0_i32, %c0_i32_0 : i32, i32, i32
  }
}

</mosaic_0001>

<llo_original>
// kernel: tpu_custom_call.1
$region0: #{tpu_custom_call.1}
  #allocation0 [shape = 'u32[]', space=smem, size = 0x4, offset = 0x4, fixed_abs, tag = 'smem constant byte address 0x4 - core index']
  #allocation1 [shape = 'u32[144,128]{1,0:T(1,128)}', space=vmem, size = 0x12000, scoped, tag = 'internal scratch']
  #allocation2 [shape = 'f32[1,32]{1,0:T(1,128)}', space=vmem, size = 0x200, scoped, tag = 'scratch operand']
  %s0 = inlined_call_operand.hbm [shape: f32[2,16,32], index: 0, kind: input, shape index: {}]
  %s1 = inlined_call_operand.hbm [shape: f32[4,32], index: 1, kind: input, shape index: {}]
  %s2 = inlined_call_operand.vmem [shape: f32[1,4], index: 2, kind: input, shape index: {}]
  %s3 = inlined_call_operand.hbm [shape: f32[2,1,32], index: 3, kind: output, shape index: {}]
  %s4 = sld [smem:[#allocation0]]
  $region61: #{tpu_custom_call.1} parent=0
    _
  %s6 = ssub.s32 1, %s4
  %s7 = scalar_select 0, %s6, %s4
  $region1: #{tpu_custom_call.1} parent=0
    #allocation3 [shape = 'u8[16384]{0}', space=vmem, size = 0x4000, scoped, tag = 'input window, operand 0']
    #allocation4 [shape = 's32[2]{0}', space=sflag, size = 0x8, scoped, tag = 'scoped memory for tpu_custom_call.1']
    #allocation5 [shape = 's32[2]{0}', space=sflag, size = 0x8, scoped, tag = 'scoped memory for tpu_custom_call.1']
    #allocation6 [shape = 'u8[2048]{0}', space=vmem, size = 0x800, scoped, tag = 'input window, operand 1, single buffered']
    #allocation7 [shape = 's32[1]{0}', space=sflag, size = 0x4, scoped, tag = 'scoped memory for tpu_custom_call.1']
    #allocation8 [shape = 'u8[1024]{0}', space=vmem, size = 0x400, scoped, tag = 'output window, operand 0']
    %8 = vsyncpa [#allocation4], 0
    %s9 = scalar_lea.sflag [#allocation4], 1
    %10 = vsyncpa %s9, 0
    %11 = vsyncpa [#allocation7], 0
    %12 = vsyncpa [#allocation5], 0
    %s13 = scalar_lea.sflag [#allocation5], 1
    %14 = vsyncpa %s13, 0
    loop: start=0, step=1, limit=4
    $region2: #{tpu_custom_call.1} parent=1 // loop_pre_header
      _
    $region3: #{tpu_custom_call.1} parent=1 // loop_header
      %s16 = sphi 0, %s20
      %p17 = scmp.ge.s32.totalorder %s16, 4
      %s23 = sphi 0, %s35
      %s24 = sphi 0, %s31
      %s25 = sphi 0, %s23
      %s26 = sphi 0, %s24
      %s27 = sphi 0, %s25
      %s28 = sphi 0, %s26
      %s40 = sphi 0, %s42
      %s43 = sphi 0, %s40
      %s44 = sphi 0, %s43
      %s60 = sphi 0, %s44
      %s64 = sphi 0, %s64
      %s66 = sphi 0, %s64
      %s67 = sphi 0, %s66
      %s81 = sphi 0, %s67
      %s85 = sphi 0, %s85
      %s87 = sphi 0, %s85
      %s88 = sphi 0, %s87
      %s102 = sphi 0, %s88
      %s108 = sphi 0, %s110
      %s111 = sphi 0, %s108
      %s112 = sphi 0, %s111
      %s128 = sphi 0, %s112
    $region4: #{tpu_custom_call.1} parent=1 // loop_header_branch
      %19 = sbr.rel (%p17) target = $region8
    $region5: #{tpu_custom_call.1} parent=1 // loop_body
      %s21 = ssub.s32 %s16, 1
      %s22 = ssub.s32 %s16, 2
      %s29 = sadd.s32 1, %s24
      %p30 = scmp.ge.s32.totalorder %s29, 1
      %s31 = scalar_select %p30, 0, %s29
      %s32 = sadd.s32 1, %s23
      %s33 = scalar_select %p30, %s32, %s23
      %p34 = scmp.ge.s32.totalorder %s33, 2
      %s35 = scalar_select %p34, 0, %s33
      %s36 = ssub.s32 %s23, %s35
      %s37 = ssub.s32 %s24, %s31
      %s38 = sor.u32 %s36, %s37
      %p39 = scmp.eq.s32.totalorder %s38, 0
      %s41 = sadd.s32 %s40, 1
      %s42 = scalar_select %p39, %s40, %s41
      %p45 = pneg %p39
      %p46 = scmp.eq.s32.totalorder %s16, 1
      %p47 = por %p45, %p46
      %p48 = scmp.ne.s32.totalorder %s40, %s43
      %p49 = scmp.eq.s32.totalorder %s16, 0
      %p50 = por %p48, %p49
      %p51 = scmp.ne.s32.totalorder %s40, %s43
      %p52 = scmp.eq.s32.totalorder %s21, 1
      %p53 = por %p51, %p52
      %p54 = scmp.ne.s32.totalorder %s43, %s44
      %p55 = scmp.eq.s32.totalorder %s21, 0
      %p56 = por %p54, %p55
      %p57 = scmp.ne.s32.totalorder %s43, %s44
      %p58 = scmp.eq.s32.totalorder %s22, 1
      %p59 = por %p57, %p58
      %p61 = scmp.ne.s32.totalorder %s44, %s60
      %p62 = scmp.eq.s32.totalorder %s22, 0
      %p63 = por %p61, %p62
      %s65 = sadd.s32 %s64, 1
      %p68 = scmp.eq.s32.totalorder %s16, 1
      %p69 = scmp.ne.s32.totalorder %s64, %s66
      %p70 = scmp.eq.s32.totalorder %s16, 0
      %p71 = por %p69, %p70
      %p72 = scmp.ne.s32.totalorder %s64, %s66
      %p73 = scmp.eq.s32.totalorder %s21, 1
      %p74 = por %p72, %p73
      %p75 = scmp.ne.s32.totalorder %s66, %s67
      %p76 = scmp.eq.s32.totalorder %s21, 0
      %p77 = por %p75, %p76
      %p78 = scmp.ne.s32.totalorder %s66, %s67
      %p79 = scmp.eq.s32.totalorder %s22, 1
      %p80 = por %p78, %p79
      %p82 = scmp.ne.s32.totalorder %s67, %s81
      %p83 = scmp.eq.s32.totalorder %s22, 0
      %p84 = por %p82, %p83
      %s86 = sadd.s32 %s85, 1
      %p89 = scmp.eq.s32.totalorder %s16, 1
      %p90 = scmp.ne.s32.totalorder %s85, %s87
      %p91 = scmp.eq.s32.totalorder %s16, 0
      %p92 = por %p90, %p91
      %p93 = scmp.ne.s32.totalorder %s85, %s87
      %p94 = scmp.eq.s32.totalorder %s21, 1
      %p95 = por %p93, %p94
      %p96 = scmp.ne.s32.totalorder %s87, %s88
      %p97 = scmp.eq.s32.totalorder %s21, 0
      %p98 = por %p96, %p97
      %p99 = scmp.ne.s32.totalorder %s87, %s88
      %p100 = scmp.eq.s32.totalorder %s22, 1
      %p101 = por %p99, %p100
      %p103 = scmp.ne.s32.totalorder %s88, %s102
      %p104 = scmp.eq.s32.totalorder %s22, 0
      %p105 = por %p103, %p104
      %s106 = ssub.s32 %s23, %s35
      %p107 = scmp.eq.s32.totalorder %s106, 0
      %s109 = sadd.s32 %s108, 1
      %s110 = scalar_select %p107, %s108, %s109
      %p113 = pneg %p107
      %p114 = scmp.eq.s32.totalorder %s16, 1
      %p115 = por %p113, %p114
      %p116 = scmp.ne.s32.totalorder %s108, %s111
      %p117 = scmp.eq.s32.totalorder %s16, 0
      %p118 = por %p116, %p117
      %p119 = scmp.ne.s32.totalorder %s108, %s111
      %p120 = scmp.eq.s32.totalorder %s21, 1
      %p121 = por %p119, %p120
      %p122 = scmp.ne.s32.totalorder %s111, %s112
      %p123 = scmp.eq.s32.totalorder %s21, 0
      %p124 = por %p122, %p123
      %p125 = scmp.ne.s32.totalorder %s111, %s112
      %p126 = scmp.eq.s32.totalorder %s22, 1
      %p127 = por %p125, %p126
      %p129 = scmp.ne.s32.totalorder %s112, %s128
      %p130 = scmp.eq.s32.totalorder %s22, 0
      %p131 = por %p129, %p130
      %p132 = scmp.le.s32.totalorder 1, %s16
      %p133 = scmp.lt.s32.totalorder %s16, 3
      %p134 = pnand %p132, %p133
      %p135 = pneg %p134
      // Predicated region
      $region9: #{tpu_custom_call.1} parent=5 // pred_check
        _
      $region10: #{tpu_custom_call.1} parent=5 // pred_check_branch
        %137 = sbr.rel (%p134) target = $region12
      $region11: #{tpu_custom_call.1} parent=5 // pred_region
        %s138 = ssub.s32 %s16, 1
        // Predicated region
        $region13: #{tpu_custom_call.1} parent=11 // pred_check
          %p139 = pneg %p77
        $region14: #{tpu_custom_call.1} parent=11 // pred_check_branch
          %141 = sbr.rel (%p139) target = $region16
        $region15: #{tpu_custom_call.1} parent=11 // pred_region
          %s143 = ssub.s32 64, 64
          %144 = vsyncadd [#allocation7], %s143
          %s146 = sshll.u32 [#allocation6], 4
          %s147 = int_to_ptr.vmem [resolvable:$true] %s146
          %149 = dma.hbm_to_vmem [thread:$0]  %s1, 64, %s147, [#allocation7]
        $region16: #{tpu_custom_call.1} parent=11 // pred_fallthru
          _
        // Predicated region
        $region17: #{tpu_custom_call.1} parent=11 // pred_check
          %p150 = pneg %p98
        $region18: #{tpu_custom_call.1} parent=11 // pred_check_branch
          %152 = sbr.rel (%p150) target = $region20
        $region19: #{tpu_custom_call.1} parent=11 // pred_region
          _
        $region20: #{tpu_custom_call.1} parent=11 // pred_fallthru
          _
      $region12: #{tpu_custom_call.1} parent=5 // pred_fallthru
        _
      %p153 = scmp.lt.s32.totalorder %s16, 2
      // Predicated region
      $region21: #{tpu_custom_call.1} parent=5 // pred_check
        %p154 = pneg %p153
      $region22: #{tpu_custom_call.1} parent=5 // pred_check_branch
        %156 = sbr.rel (%p154) target = $region24
      $region23: #{tpu_custom_call.1} parent=5 // pred_region
        // Predicated region
        $region25: #{tpu_custom_call.1} parent=23 // pred_check
          %p157 = pneg %p50
        $region26: #{tpu_custom_call.1} parent=23 // pred_check_branch
          %159 = sbr.rel (%p157) target = $region28
        $region27: #{tpu_custom_call.1} parent=23 // pred_region
          %s160 = sand.u32 %s40, 1
          %s161 = scalar_lea.sflag [#allocation4], %s160
          %s162 = sand.u32 %s40, 1
          %s163 = smul.addr %s162, 16
          %s164 = scalar_lea.vmem [#allocation3], %s163
          %s165 = smul.u32 2, %s24
          %s167 = ssub.s32 256, 256
          %168 = vsyncadd %s161, %s167
          %s169 = smul.addr %s23, 2
          %s170 = sadd.s32 %s165, %s169
          %s171 = smul.addr %s170, 128
          %s172 = scalar_lea.hbm %s0, %s171
          %s173 = sshll.u32 %s164, 4
          %s174 = int_to_ptr.vmem [resolvable:$true] %s173
          %179 = dma.hbm_to_vmem [thread:$0]  %s172, 256, %s174, %s161, 128, 128, 8
        $region28: #{tpu_custom_call.1} parent=23 // pred_fallthru
          _
      $region24: #{tpu_custom_call.1} parent=5 // pred_fallthru
        _
      %p180 = scmp.le.s32.totalorder 1, %s16
      %p181 = scmp.lt.s32.totalorder %s16, 3
      %p182 = pnand %p180, %p181
      %p183 = pneg %p182
      // Predicated region
      $region29: #{tpu_custom_call.1} parent=5 // pred_check
        _
      $region30: #{tpu_custom_call.1} parent=5 // pred_check_branch
        %185 = sbr.rel (%p182) target = $region32
      $region31: #{tpu_custom_call.1} parent=5 // pred_region
        %s186 = ssub.s32 %s16, 1
        %s187 = sand.u32 %s43, 1
        %s188 = scalar_lea.sflag [#allocation4], %s187
        %s189 = sand.u32 %s43, 1
        %s190 = smul.addr %s189, 16
        %s191 = scalar_lea.vmem [#allocation3], %s190
        // Predicated region
        $region33: #{tpu_custom_call.1} parent=31 // pred_check
          %p192 = pneg %p56
        $region34: #{tpu_custom_call.1} parent=31 // pred_check_branch
          %194 = sbr.rel (%p192) target = $region36
        $region35: #{tpu_custom_call.1} parent=31 // pred_region
          %195 = dma.done %s188, 256
        $region36: #{tpu_custom_call.1} parent=31 // pred_fallthru
          _
        // Predicated region
        $region37: #{tpu_custom_call.1} parent=31 // pred_check
          %p196 = pneg %p77
        $region38: #{tpu_custom_call.1} parent=31 // pred_check_branch
          %198 = sbr.rel (%p196) target = $region40
        $region39: #{tpu_custom_call.1} parent=31 // pred_region
          %199 = dma.done [#allocation7], 64
        $region40: #{tpu_custom_call.1} parent=31 // pred_fallthru
          _
        %s200 = sand.u32 %s43, 1
        %s201 = scalar_lea.sflag [#allocation4], %s200
        %s202 = sand.u32 %s43, 1
        %s203 = smul.addr %s202, 16
        %s204 = scalar_lea.vmem [#allocation3], %s203
        %p205 = pneg %p56
        %p206 = pneg %p53
        %p207 = pneg %p77
        %p208 = pneg %p74
        %p209 = pneg %p98
        %p210 = pneg %p95
        %p211 = pneg %p124
        %p212 = pneg %p121
        %s213 = sand.u32 %s111, 1
        %s214 = scalar_lea.sflag [#allocation5], %s213
        %s215 = sand.u32 %s111, 1
        %s216 = scalar_lea.vmem [#allocation8], %s215
        %s217 = smul.u32 2, %s26
        %p218 = scmp.eq.s32.totalorder %s26, 0
        // Predicated region
        $region41: #{tpu_custom_call.1} parent=31 // pred_check
          %p219 = pneg %p218
        $region42: #{tpu_custom_call.1} parent=31 // pred_check_branch
          %221 = sbr.rel (%p219) target = $region44
        $region43: #{tpu_custom_call.1} parent=31 // pred_region
          %vm222 = vcmask 253952
          %223 = vst.msk [vmem:[#allocation2] sm:$0x1] %vm222, 0.0
        $region44: #{tpu_custom_call.1} parent=31 // pred_fallthru
          _
        %v224 = vld [vmem:[%s191] sm:$0xff]
        %v225 = vld [vmem:[%s191 + $0x8] sm:$0xff]
        %v226 = vld [vmem:[#allocation6] sm:$0xf]
        %v227 = vmul.f32 %v226, 0.5
        %v228 = vld [vmem:[%s2] sm:$0x1]
        %vm229 = vcmask 261120
        %v231 = vsel %vm229, %v224, 0
        %v234 = vsel %vm229, %v225, 0
        %v237 = vsel %vm229, %v227, 0
        %239 = vmatprep.subr.mxu0 0.0
        %240 = vmatpush1.xpose.msra.mxu0 0.0
        %241 = vmatprep.subr.mxu0 0.0
        %242 = vmatpush1.xpose.msra.mxu0 0.0
        %243 = vmatprep.subr.mxu0 0.0
        %244 = vmatpush1.xpose.msra.mxu0 0.0
        %245 = vmatprep.subr.mxu0 0.0
        %246 = vmatpush1.xpose.msra.mxu0 0.0
        %247 = vmatprep.subr.mxu0 0.0
        %248 = vmatpush1.xpose.msra.mxu0 0.0
        %249 = vmatprep.subr.mxu0 0.0
        %250 = vmatpush1.xpose.msra.mxu0 0.0
        %251 = vmatprep.subr.mxu0 0.0
        %252 = vmatpush1.xpose.msra.mxu0 0.0
        %253 = vmatprep.subr.mxu0 0.0
        %254 = vmatpush1.xpose.msra.mxu0 0.0
        %255 = vmatprep.subr.mxu0 0.0
        %256 = vmatpush1.xpose.msra.mxu0 0.0
        %257 = vmatprep.subr.mxu0 0.0
        %258 = vmatpush1.xpose.msra.mxu0 0.0
        %259 = vmatprep.subr.mxu0 0.0
        %260 = vmatpush1.xpose.msra.mxu0 0.0
        %261 = vmatprep.subr.mxu0 0.0
        %262 = vmatpush1.xpose.msra.mxu0 0.0
        %263 = vmatprep.subr.mxu0 0.0
        %264 = vmatpush1.xpose.msra.mxu0 0.0
        %265 = vmatprep.subr.mxu0 0.0
        %266 = vmatpush1.xpose.msra.mxu0 0.0
        %267 = vmatprep.subr.mxu0 0.0
        %268 = vmatpush1.xpose.msra.mxu0 0.0
        %269 = vmatprep.subr.mxu0 0.0
        %270 = vmatpush1.xpose.msra.mxu0 %v237
        %271 = vmatprep.subr.mxu0 0.0
        %272 = vmatpush2.xpose.msra.mxu0 0.0
        %273 = vmatprep.subr.mxu0 0.0
        %274 = vmatpush2.xpose.msra.mxu0 0.0
        %275 = vmatprep.subr.mxu0 0.0
        %276 = vmatpush2.xpose.msra.mxu0 0.0
        %277 = vmatprep.subr.mxu0 0.0
        %278 = vmatpush2.xpose.msra.mxu0 0.0
        %279 = vmatprep.subr.mxu0 0.0
        %280 = vmatpush2.xpose.msra.mxu0 0.0
        %281 = vmatprep.subr.mxu0 0.0
        %282 = vmatpush2.xpose.msra.mxu0 0.0
        %283 = vmatprep.subr.mxu0 0.0
        %284 = vmatpush2.xpose.msra.mxu0 0.0
        %285 = vmatprep.subr.mxu0 0.0
        %286 = vmatpush2.xpose.msra.mxu0 0.0
        %287 = vmatprep.subr.mxu0 0.0
        %288 = vmatpush2.xpose.msra.mxu0 0.0
        %289 = vmatprep.subr.mxu0 0.0
        %290 = vmatpush2.xpose.msra.mxu0 0.0
        %291 = vmatprep.subr.mxu0 0.0
        %292 = vmatpush2.xpose.msra.mxu0 0.0
        %293 = vmatprep.subr.mxu0 0.0
        %294 = vmatpush2.xpose.msra.mxu0 0.0
        %295 = vmatprep.subr.mxu0 0.0
        %296 = vmatpush2.xpose.msra.mxu0 0.0
        %297 = vmatprep.subr.mxu0 0.0
        %298 = vmatpush2.xpose.msra.mxu0 0.0
        %299 = vmatprep.subr.mxu0 0.0
        %300 = vmatpush2.xpose.msra.mxu0 0.0
        %301 = vmatprep.subr.mxu0 0.0
        %302 = vmatpush2.xpose.msra.mxu0 0.0
        %303 = vmatprep.mubr.f32.mxu0 0.0
        %304 = vmatmul.mubr.f32.gmra.mxu0 %v231
        %v305 = vpop.f32.mrf.mxu0
        %v306 = vadd.f32 0.0, %v305
        %v307 = vpop.f32.mrf.mxu0
        %308 = vmatprep.mubr.f32.mxu0 0.0
        %309 = vmatmul.mubr.f32.gmra.mxu0 %v234
        %v310 = vpop.f32.mrf.mxu0
        %v311 = vadd.f32 0.0, %v310
        %v312 = vpop.f32.mrf.mxu0
        %313 = vdwg.mxu0
        %vm314 = vcmask 31744
        %v315 = vsel %vm314, %v306, -inf
        %316 = vmax.xlane.f32.xlu0 %v315
        %v317 = vpop.xlane.xlu0 %316
        %v318 = vsel %vm314, %v311, -inf
        %319 = vmax.xlane.f32.xlu0 %v318
        %v320 = vpop.xlane.xlu0 %319
        %v321 = vsub.f32 %v306, %v317
        %v322 = vsub.f32 %v311, %v320
        %v323 = vmul.f32 %v321, 1.442695
        %v324 = vpow.pop %v323
        %v325 = vmul.f32 %v322, 1.442695
        %v326 = vpow.pop %v325
        %v327 = vsel %vm314, %v324, 0.0
        %328 = vadd.xlane.f32.xlu0 %v327
        %v329 = vpop.xlane.xlu0 %328
        %v330 = vsel %vm314, %v326, 0.0
        %331 = vadd.xlane.f32.xlu0 %v330
        %v332 = vpop.xlane.xlu0 %331
        %v334 = vlaneseq
        %v335 = vshrl.u32 %v334, 7
        %v336 = vsub.s32 0, %v335
        %v337 = vrot.slane %v228, %v336
        %v339 = vmul.f32 %v324, %v337
        %v340 = vmul.f32 %v326, %v337
        %v341 = vsel %vm314, %v339, 0.0
        %342 = vadd.xlane.f32.xlu0 %v341
        %v343 = vpop.xlane.xlu0 %342
        %v344 = vsel %vm314, %v340, 0.0
        %345 = vadd.xlane.f32.xlu0 %v344
        %v346 = vpop.xlane.xlu0 %345
        %v347 = vrcp.pop %v329
        %v348 = vmul.f32 %v343, %v347
        %v349 = vrcp.pop %v332
        %v350 = vmul.f32 %v346, %v349
        %351 = vxpose.xlu0.b32.start [1/16] %v348, 128
        %352 = vxpose.xlu0.b32.cont [2/16] %v350, 128
        %353 = vxpose.xlu0.b32.cont [3/16] 0.0, 128
        %354 = vxpose.xlu0.b32.cont [4/16] 0.0, 128
        %355 = vxpose.xlu0.b32.cont [5/16] 0.0, 128
        %356 = vxpose.xlu0.b32.cont [6/16] 0.0, 128
        %357 = vxpose.xlu0.b32.cont [7/16] 0.0, 128
        %358 = vxpose.xlu0.b32.cont [8/16] 0.0, 128
        %359 = vxpose.xlu0.b32.cont [9/16] 0.0, 128
        %360 = vxpose.xlu0.b32.cont [10/16] 0.0, 128
        %361 = vxpose.xlu0.b32.cont [11/16] 0.0, 128
        %362 = vxpose.xlu0.b32.cont [12/16] 0.0, 128
        %363 = vxpose.xlu0.b32.cont [13/16] 0.0, 128
        %364 = vxpose.xlu0.b32.cont [14/16] 0.0, 128
        %365 = vxpose.xlu0.b32.cont [15/16] 0.0, 128
        %366 = vxpose.xlu0.b32.end [16/16] 0.0, 128
        %v367 = vpop.trf.xlu0
        %v368 = vpop.trf.xlu0
        %v369 = vpop.trf.xlu0
        %v370 = vpop.trf.xlu0
        %v371 = vpop.trf.xlu0
        %v372 = vpop.trf.xlu0
        %v373 = vpop.trf.xlu0
        %v374 = vpop.trf.xlu0
        %v375 = vpop.trf.xlu0
        %v376 = vpop.trf.xlu0
        %v377 = vpop.trf.xlu0
        %v378 = vpop.trf.xlu0
        %v379 = vpop.trf.xlu0
        %v380 = vpop.trf.xlu0
        %v381 = vpop.trf.xlu0
        %v382 = vpop.trf.xlu0
        %vm383 = vcmask 130048
        %v385 = vsel %vm383, %v367, 0
        %387 = vmatprep.subr.mxu0 0.0
        %388 = vmatpush1.msra.mxu0 0.0
        %389 = vmatprep.subr.mxu0 0.0
        %390 = vmatpush1.msra.mxu0 0.0
        %391 = vmatprep.subr.mxu0 0.0
        %392 = vmatpush1.msra.mxu0 0.0
        %393 = vmatprep.subr.mxu0 0.0
        %394 = vmatpush1.msra.mxu0 0.0
        %395 = vmatprep.subr.mxu0 0.0
        %396 = vmatpush1.msra.mxu0 0.0
        %397 = vmatprep.subr.mxu0 0.0
        %398 = vmatpush1.msra.mxu0 0.0
        %399 = vmatprep.subr.mxu0 0.0
        %400 = vmatpush1.msra.mxu0 0.0
        %401 = vmatprep.subr.mxu0 0.0
        %402 = vmatpush1.msra.mxu0 0.0
        %403 = vmatprep.subr.mxu0 0.0
        %404 = vmatpush1.msra.mxu0 0.0
        %405 = vmatprep.subr.mxu0 0.0
        %406 = vmatpush1.msra.mxu0 0.0
        %407 = vmatprep.subr.mxu0 0.0
        %408 = vmatpush1.msra.mxu0 0.0
        %409 = vmatprep.subr.mxu0 0.0
        %410 = vmatpush1.msra.mxu0 0.0
        %411 = vmatprep.subr.mxu0 0.0
        %412 = vmatpush1.msra.mxu0 0.0
        %413 = vmatprep.subr.mxu0 0.0
        %414 = vmatpush1.msra.mxu0 0.0
        %415 = vmatprep.subr.mxu0 0.0
        %416 = vmatpush1.msra.mxu0 %v225
        %417 = vmatprep.subr.mxu0 0.0
        %418 = vmatpush1.msra.mxu0 %v224
        %419 = vmatprep.subr.mxu0 0.0
        %420 = vmatpush2.msra.mxu0 0.0
        %421 = vmatprep.subr.mxu0 0.0
        %422 = vmatpush2.msra.mxu0 0.0
        %423 = vmatprep.subr.mxu0 0.0
        %424 = vmatpush2.msra.mxu0 0.0
        %425 = vmatprep.subr.mxu0 0.0
        %426 = vmatpush2.msra.mxu0 0.0
        %427 = vmatprep.subr.mxu0 0.0
        %428 = vmatpush2.msra.mxu0 0.0
        %429 = vmatprep.subr.mxu0 0.0
        %430 = vmatpush2.msra.mxu0 0.0
        %431 = vmatprep.subr.mxu0 0.0
        %432 = vmatpush2.msra.mxu0 0.0
        %433 = vmatprep.subr.mxu0 0.0
        %434 = vmatpush2.msra.mxu0 0.0
        %435 = vmatprep.subr.mxu0 0.0
        %436 = vmatpush2.msra.mxu0 0.0
        %437 = vmatprep.subr.mxu0 0.0
        %438 = vmatpush2.msra.mxu0 0.0
        %439 = vmatprep.subr.mxu0 0.0
        %440 = vmatpush2.msra.mxu0 0.0
        %441 = vmatprep.subr.mxu0 0.0
        %442 = vmatpush2.msra.mxu0 0.0
        %443 = vmatprep.subr.mxu0 0.0
        %444 = vmatpush2.msra.mxu0 0.0
        %445 = vmatprep.subr.mxu0 0.0
        %446 = vmatpush2.msra.mxu0 0.0
        %447 = vmatprep.subr.mxu0 0.0
        %448 = vmatpush2.msra.mxu0 0.0
        %449 = vmatprep.subr.mxu0 0.0
        %450 = vmatpush2.msra.mxu0 0.0
        %451 = vmatprep.mubr.f32.mxu0 0.0
        %452 = vmatmul.mubr.f32.gmra.mxu0 %v385
        %v453 = vpop.f32.mrf.mxu0
        %v454 = vadd.f32 0.0, %v453
        %v455 = vpop.f32.mrf.mxu0
        %456 = vdwg.mxu0
        %v457 = vld [vmem:[#allocation2] sm:$0x1]
        %v458 = vadd.f32 %v457, %v454
        %vm459 = vcmask 253952
        %460 = vst.msk [vmem:[#allocation2] sm:$0x1] %vm459, %v458
        // Predicated region
        $region45: #{tpu_custom_call.1} parent=31 // pred_check
          %p461 = pneg %p218
        $region46: #{tpu_custom_call.1} parent=31 // pred_check_branch
          %463 = sbr.rel (%p461) target = $region48
        $region47: #{tpu_custom_call.1} parent=31 // pred_region
          %v464 = vld [vmem:[#allocation2] sm:$0x1]
          %465 = vst.msk [vmem:[%s216] sm:$0x1] %vm459, %v464
        $region48: #{tpu_custom_call.1} parent=31 // pred_fallthru
          _
        %s466 = sand.u32 %s111, 1
        %s467 = scalar_lea.sflag [#allocation5], %s466
        %s468 = sand.u32 %s111, 1
        %s469 = scalar_lea.vmem [#allocation8], %s468
        // Predicated region
        $region49: #{tpu_custom_call.1} parent=31 // pred_check
          %p470 = pneg %p121
        $region50: #{tpu_custom_call.1} parent=31 // pred_check_branch
          %472 = sbr.rel (%p470) target = $region52
        $region51: #{tpu_custom_call.1} parent=31 // pred_region
          %s474 = ssub.s32 16, 16
          %475 = vsyncadd %s467, %s474
          %s476 = smul.addr %s25, 16
          %s477 = scalar_lea.hbm %s3, %s476
          %s479 = sshll.u32 %s469, 4
          %s480 = int_to_ptr.vmem [resolvable:$true] %s479
          %482 = dma.vmem_to_hbm [thread:$0]  %s480, 16, %s477, %s467
        $region52: #{tpu_custom_call.1} parent=31 // pred_fallthru
          _
      $region32: #{tpu_custom_call.1} parent=5 // pred_fallthru
        _
      %p483 = scmp.le.s32.totalorder 2, %s16
      // Predicated region
      $region53: #{tpu_custom_call.1} parent=5 // pred_check
        %p484 = pneg %p483
      $region54: #{tpu_custom_call.1} parent=5 // pred_check_branch
        %486 = sbr.rel (%p484) target = $region56
      $region55: #{tpu_custom_call.1} parent=5 // pred_region
        %s487 = ssub.s32 %s16, 2
        // Predicated region
        $region57: #{tpu_custom_call.1} parent=55 // pred_check
          %p488 = pneg %p127
        $region58: #{tpu_custom_call.1} parent=55 // pred_check_branch
          %490 = sbr.rel (%p488) target = $region60
        $region59: #{tpu_custom_call.1} parent=55 // pred_region
          %s491 = sand.u32 %s112, 1
          %s492 = scalar_lea.sflag [#allocation5], %s491
          %s493 = sand.u32 %s112, 1
          %s494 = scalar_lea.vmem [#allocation8], %s493
          %495 = dma.done %s492, 16
        $region60: #{tpu_custom_call.1} parent=55 // pred_fallthru
          _
      $region56: #{tpu_custom_call.1} parent=5 // pred_fallthru
        _
    $region6: #{tpu_custom_call.1} parent=1 // loop_footer
      %s20 = sadd.s32 1, %s16
    $region7: #{tpu_custom_call.1} parent=1 // loop_footer_branch
      %15 = sbr.rel target = $region3
    $region8: #{tpu_custom_call.1} parent=1 // loop_exit
      _
    %496 = vsyncpa [#allocation4], 1
    %s497 = scalar_lea.sflag [#allocation4], 1
    %498 = vsyncpa %s497, 1
    %499 = vsyncpa [#allocation7], 1
    %500 = vsyncpa [#allocation5], 1
    %s501 = scalar_lea.sflag [#allocation5], 1
    %502 = vsyncpa %s501, 1

</llo_original>
